<compile_context>
chip_gen: v5e
topology: v5e:2x2
jax: 0.10.0
libtpu: 0.0.40
codegen_flags: <defaults>
</compile_context>

<pallas_src>
import jax
import jax.numpy as jnp
from jax import lax
from jax.experimental import pallas as pl
from jax.experimental.pallas import tpu as pltpu


def _round_up(x, m):
    return ((x + m - 1) // m) * m


def _linear_complex_kernel(xr_ref, xi_ref, wr_ref, wi_ref,
                           or_ref, oi_ref, acc_r_ref, acc_i_ref):
    k = pl.program_id(2)

    @pl.when(k == 0)
    def _():
        acc_r_ref[...] = jnp.zeros_like(acc_r_ref)
        acc_i_ref[...] = jnp.zeros_like(acc_i_ref)

    xr = xr_ref[...]
    xi = xi_ref[...]
    wr = wr_ref[...]
    wi = wi_ref[...]

    # Weights are in torch layout (out_features, in_features): contract the
    # last dim of x with the last dim of w (no transpose materialized in HBM).
    dn = (((1,), (1,)), ((), ()))

    # Gauss / Karatsuba complex multiply: 3 MXU matmuls, f32 accumulation.
    p1 = lax.dot_general(xr, wr, dn, preferred_element_type=jnp.float32)
    p2 = lax.dot_general(xi, wi, dn, preferred_element_type=jnp.float32)
    p3 = lax.dot_general(xr + xi, wr + wi, dn,
                         preferred_element_type=jnp.float32)

    acc_r_ref[...] += p1 - p2
    acc_i_ref[...] += p3 - p1 - p2

    @pl.when(k == pl.num_programs(2) - 1)
    def _():
        or_ref[...] = acc_r_ref[...].astype(or_ref.dtype)
        oi_ref[...] = acc_i_ref[...].astype(oi_ref.dtype)


def linear_complex(x_r, x_i, weight_r, weight_i, *,
                   tm=256, tn=256, tk=512, compute_dtype=None):
    """Pallas complex linear layer.

    x_r, x_i:           (M, in_features)
    weight_r, weight_i: (out_features, in_features)  (torch.nn.Linear layout)
    compute_dtype:      optional (e.g. jnp.bfloat16) MXU compute dtype;
                        accumulation is always f32, output keeps input dtype.
    returns (out_r, out_i): (M, out_features)
    """
    M, K = x_r.shape
    N, K2 = weight_r.shape
    assert K == K2, "in_features mismatch"
    assert x_i.shape == x_r.shape
    assert weight_i.shape == weight_r.shape
    out_dtype = x_r.dtype

    if compute_dtype is not None:
        x_r = x_r.astype(compute_dtype)
        x_i = x_i.astype(compute_dtype)
        weight_r = weight_r.astype(compute_dtype)
        weight_i = weight_i.astype(compute_dtype)
    in_bytes = jnp.dtype(x_r.dtype).itemsize
    out_bytes = jnp.dtype(out_dtype).itemsize

    # Tile sizes: lane dims multiples of 128, sublane dim multiple of 8/16.
    sub = 16 if in_bytes == 2 else 8
    tm = min(tm, _round_up(M, sub))
    tn = min(tn, _round_up(N, 128))
    tk = min(tk, _round_up(K, 128))

    M_p = _round_up(M, tm)
    N_p = _round_up(N, tn)
    K_p = _round_up(K, tk)

    # Zero-pad ragged edges (zeros contribute nothing to the dots).
    if (M_p, K_p) != (M, K):
        x_r = jnp.pad(x_r, ((0, M_p - M), (0, K_p - K)))
        x_i = jnp.pad(x_i, ((0, M_p - M), (0, K_p - K)))
    if (N_p, K_p) != (N, K):
        weight_r = jnp.pad(weight_r, ((0, N_p - N), (0, K_p - K)))
        weight_i = jnp.pad(weight_i, ((0, N_p - N), (0, K_p - K)))

    grid = (M_p // tm, N_p // tn, K_p // tk)

    # VMEM budget: double-buffered x / w / out tiles + 2 f32 accumulators.
    vmem_need = ((2 * 2 * tm * tk + 2 * 2 * tn * tk) * in_bytes
                 + 2 * 2 * tm * tn * out_bytes
                 + 2 * tm * tn * 4)
    vmem_limit = int(min(max(2 * vmem_need, 32 << 20), 64 << 20))

    out_r, out_i = pl.pallas_call(
        _linear_complex_kernel,
        out_shape=(
            jax.ShapeDtypeStruct((M_p, N_p), out_dtype),
            jax.ShapeDtypeStruct((M_p, N_p), out_dtype),
        ),
        grid_spec=pltpu.PrefetchScalarGridSpec(
            num_scalar_prefetch=0,
            grid=grid,
            in_specs=[
                pl.BlockSpec((tm, tk), lambda i, j, k: (i, k)),  # x_r tile
                pl.BlockSpec((tm, tk), lambda i, j, k: (i, k)),  # x_i tile
                pl.BlockSpec((tn, tk), lambda i, j, k: (j, k)),  # W_r tile (N,K)
                pl.BlockSpec((tn, tk), lambda i, j, k: (j, k)),  # W_i tile (N,K)
            ],
            out_specs=[
                pl.BlockSpec((tm, tn), lambda i, j, k: (i, j)),
                pl.BlockSpec((tm, tn), lambda i, j, k: (i, j)),
            ],
            scratch_shapes=[
                pltpu.VMEM((tm, tn), jnp.float32),
                pltpu.VMEM((tm, tn), jnp.float32),
            ],
        ),
        compiler_params=pltpu.CompilerParams(
            dimension_semantics=("parallel", "parallel", "arbitrary"),
            vmem_limit_bytes=vmem_limit,
        ),
    )(x_r, x_i, weight_r, weight_i)

    if (M_p, N_p) != (M, N):
        out_r = out_r[:M, :N]
        out_i = out_i[:M, :N]
    return out_r, out_i


def _reference(x_r, x_i, weight_r, weight_i):
    rr = x_r @ weight_r.T
    ri = x_r @ weight_i.T
    ir = x_i @ weight_r.T
    ii = x_i @ weight_i.T
    return rr - ii, ri + ir


if __name__ == "__main__":
    # Deterministic synthetic params/inputs (no checkpoint load).
    batch = 8
    in_features = 32
    out_features = 32

    key = jax.random.PRNGKey(0)
    k1, k2, k3, k4 = jax.random.split(key, 4)
    x_r = jax.random.normal(k1, (batch, in_features), dtype=jnp.float32)
    x_i = jax.random.normal(k2, (batch, in_features), dtype=jnp.float32)
    # torch.nn.Linear weight layout: (out_features, in_features)
    weight_r = jax.random.normal(k3, (out_features, in_features), dtype=jnp.float32)
    weight_i = jax.random.normal(k4, (out_features, in_features), dtype=jnp.float32)

    ref_r, ref_i = _reference(x_r, x_i, weight_r, weight_i)

    # f32 compute path: tight check.
    out_r, out_i = linear_complex(x_r, x_i, weight_r, weight_i)
    jax.block_until_ready((out_r, out_i))
    assert out_r.shape == (batch, out_features)
    assert out_i.shape == (batch, out_features)
    assert jnp.allclose(out_r, ref_r, atol=1e-3, rtol=1e-3)
    assert jnp.allclose(out_i, ref_i, atol=1e-3, rtol=1e-3)

    # bf16 MXU path (f32 accumulation): loose sanity check.
    out_r16, out_i16 = linear_complex(x_r, x_i, weight_r, weight_i,
                                      compute_dtype=jnp.bfloat16)
    jax.block_until_ready((out_r16, out_i16))
    assert float(jnp.max(jnp.abs(out_r16 - ref_r))) < 0.5
    assert float(jnp.max(jnp.abs(out_i16 - ref_i))) < 0.5

    print("KERNEL_OK")
</pallas_src>

<mosaic_0001>
module attributes {stable_mosaic.version = 11 : i64} {
  func.func @_linear_complex_kernel(%arg0: i32, %arg1: i32, %arg2: i32, %arg3: memref<8x128xf32, #tpu.memory_space<vmem>>, %arg4: memref<8x128xf32, #tpu.memory_space<vmem>>, %arg5: memref<128x128xf32, #tpu.memory_space<vmem>>, %arg6: memref<128x128xf32, #tpu.memory_space<vmem>>, %arg7: memref<8x128xf32, #tpu.memory_space<vmem>>, %arg8: memref<8x128xf32, #tpu.memory_space<vmem>>, %arg9: memref<8x128xf32, #tpu.memory_space<vmem>>, %arg10: memref<8x128xf32, #tpu.memory_space<vmem>>) attributes {dimension_semantics = [#tpu.dimension_semantics<parallel>, #tpu.dimension_semantics<parallel>, #tpu.dimension_semantics<arbitrary>], iteration_bounds = array<i64: 1, 1, 1>, scalar_prefetch = 0 : i64, scratch_operands = 2 : i64, tpu.core_type = #tpu.core_type<tc>, window_params = [{transform_indices = @transform_0, window_bounds = array<i64: 8, 128>}, {transform_indices = @transform_1, window_bounds = array<i64: 8, 128>}, {transform_indices = @transform_2, window_bounds = array<i64: 128, 128>}, {transform_indices = @transform_3, window_bounds = array<i64: 128, 128>}, {transform_indices = @transform_4, window_bounds = array<i64: 8, 128>}, {transform_indices = @transform_5, window_bounds = array<i64: 8, 128>}]} {
    %c0_i32 = arith.constant 0 : i32
    %0 = arith.cmpi eq, %arg2, %c0_i32 : i32
    %1 = arith.extui %0 : i1 to i32
    %c0_i32_0 = arith.constant 0 : i32
    %2 = arith.cmpi ne, %1, %c0_i32_0 : i32
    scf.if %2 {
      %cst_20 = arith.constant 0.000000e+00 : f32
      %24 = vector.broadcast %cst_20 : f32 to vector<8x128xf32>
      %c0_21 = arith.constant 0 : index
      %c0_22 = arith.constant 0 : index
      %25 = vector.load %arg9[%c0_21, %c0_22] : memref<8x128xf32, #tpu.memory_space<vmem>>, vector<8x128xf32>
      tpu.vector_store %arg9[%c0_21, %c0_22], %24 {strides = array<i32>} : memref<8x128xf32, #tpu.memory_space<vmem>>, vector<8x128xf32>,
      %cst_23 = arith.constant 0.000000e+00 : f32
      %26 = vector.broadcast %cst_23 : f32 to vector<8x128xf32>
      %c0_24 = arith.constant 0 : index
      %c0_25 = arith.constant 0 : index
      %27 = vector.load %arg10[%c0_24, %c0_25] : memref<8x128xf32, #tpu.memory_space<vmem>>, vector<8x128xf32>
      tpu.vector_store %arg10[%c0_24, %c0_25], %26 {strides = array<i32>} : memref<8x128xf32, #tpu.memory_space<vmem>>, vector<8x128xf32>,
    } else {
    }
    %c0 = arith.constant 0 : index
    %c0_1 = arith.constant 0 : index
    %3 = vector.load %arg3[%c0, %c0_1] : memref<8x128xf32, #tpu.memory_space<vmem>>, vector<8x128xf32>
    %c0_2 = arith.constant 0 : index
    %c0_3 = arith.constant 0 : index
    %4 = vector.load %arg4[%c0_2, %c0_3] : memref<8x128xf32, #tpu.memory_space<vmem>>, vector<8x128xf32>
    %c0_4 = arith.constant 0 : index
    %c0_5 = arith.constant 0 : index
    %5 = vector.load %arg5[%c0_4, %c0_5] : memref<128x128xf32, #tpu.memory_space<vmem>>, vector<128x128xf32>
    %c0_6 = arith.constant 0 : index
    %c0_7 = arith.constant 0 : index
    %6 = vector.load %arg6[%c0_6, %c0_7] : memref<128x128xf32, #tpu.memory_space<vmem>>, vector<128x128xf32>
    %cst = arith.constant dense<0.000000e+00> : vector<8x128xf32>
    %7 = tpu.matmul %3, %5, %cst {dimension_numbers = #tpu.dot_dimension_numbers<[1], [1], [0], [0], [0, 0, 1, 0], [], []>} : vector<8x128xf32>, vector<128x128xf32>, vector<8x128xf32> -> vector<8x128xf32>
    %cst_8 = arith.constant dense<0.000000e+00> : vector<8x128xf32>
    %8 = tpu.matmul %4, %6, %cst_8 {dimension_numbers = #tpu.dot_dimension_numbers<[1], [1], [0], [0], [0, 0, 1, 0], [], []>} : vector<8x128xf32>, vector<128x128xf32>, vector<8x128xf32> -> vector<8x128xf32>
    %9 = arith.addf %3, %4 : vector<8x128xf32>
    %10 = arith.addf %5, %6 : vector<128x128xf32>
    %cst_9 = arith.constant dense<0.000000e+00> : vector<8x128xf32>
    %11 = tpu.matmul %9, %10, %cst_9 {dimension_numbers = #tpu.dot_dimension_numbers<[1], [1], [0], [0], [0, 0, 1, 0], [], []>} : vector<8x128xf32>, vector<128x128xf32>, vector<8x128xf32> -> vector<8x128xf32>
    %c0_10 = arith.constant 0 : index
    %c0_11 = arith.constant 0 : index
    %12 = vector.load %arg9[%c0_10, %c0_11] : memref<8x128xf32, #tpu.memory_space<vmem>>, vector<8x128xf32>
    %13 = arith.subf %7, %8 : vector<8x128xf32>
    %14 = arith.addf %12, %13 : vector<8x128xf32>
    %c0_12 = arith.constant 0 : index
    %c0_13 = arith.constant 0 : index
    %15 = vector.load %arg9[%c0_12, %c0_13] : memref<8x128xf32, #tpu.memory_space<vmem>>, vector<8x128xf32>
    tpu.vector_store %arg9[%c0_12, %c0_13], %14 {strides = array<i32>} : memref<8x128xf32, #tpu.memory_space<vmem>>, vector<8x128xf32>,
    %c0_14 = arith.constant 0 : index
    %c0_15 = arith.constant 0 : index
    %16 = vector.load %arg10[%c0_14, %c0_15] : memref<8x128xf32, #tpu.memory_space<vmem>>, vector<8x128xf32>
    %17 = arith.subf %11, %7 : vector<8x128xf32>
    %18 = arith.subf %17, %8 : vector<8x128xf32>
    %19 = arith.addf %16, %18 : vector<8x128xf32>
    %c0_16 = arith.constant 0 : index
    %c0_17 = arith.constant 0 : index
    %20 = vector.load %arg10[%c0_16, %c0_17] : memref<8x128xf32, #tpu.memory_space<vmem>>, vector<8x128xf32>
    tpu.vector_store %arg10[%c0_16, %c0_17], %19 {strides = array<i32>} : memref<8x128xf32, #tpu.memory_space<vmem>>, vector<8x128xf32>,
    %c0_i32_18 = arith.constant 0 : i32
    %21 = arith.cmpi eq, %arg2, %c0_i32_18 : i32
    %22 = arith.extui %21 : i1 to i32
    %c0_i32_19 = arith.constant 0 : i32
    %23 = arith.cmpi ne, %22, %c0_i32_19 : i32
    scf.if %23 {
      %c0_20 = arith.constant 0 : index
      %c0_21 = arith.constant 0 : index
      %24 = vector.load %arg9[%c0_20, %c0_21] : memref<8x128xf32, #tpu.memory_space<vmem>>, vector<8x128xf32>
      %c0_22 = arith.constant 0 : index
      %c0_23 = arith.constant 0 : index
      %25 = vector.load %arg7[%c0_22, %c0_23] : memref<8x128xf32, #tpu.memory_space<vmem>>, vector<8x128xf32>
      tpu.vector_store %arg7[%c0_22, %c0_23], %24 {strides = array<i32>} : memref<8x128xf32, #tpu.memory_space<vmem>>, vector<8x128xf32>,
      %c0_24 = arith.constant 0 : index
      %c0_25 = arith.constant 0 : index
      %26 = vector.load %arg10[%c0_24, %c0_25] : memref<8x128xf32, #tpu.memory_space<vmem>>, vector<8x128xf32>
      %c0_26 = arith.constant 0 : index
      %c0_27 = arith.constant 0 : index
      %27 = vector.load %arg8[%c0_26, %c0_27] : memref<8x128xf32, #tpu.memory_space<vmem>>, vector<8x128xf32>
      tpu.vector_store %arg8[%c0_26, %c0_27], %26 {strides = array<i32>} : memref<8x128xf32, #tpu.memory_space<vmem>>, vector<8x128xf32>,
    } else {
    }
    return
  }
  func.func @transform_0(%arg0: i32, %arg1: i32, %arg2: i32) -> (i32, i32) {
    %c0_i32 = arith.constant 0 : i32
    return %arg0, %arg2 : i32, i32
  }
  func.func @transform_1(%arg0: i32, %arg1: i32, %arg2: i32) -> (i32, i32) {
    %c0_i32 = arith.constant 0 : i32
    return %arg0, %arg2 : i32, i32
  }
  func.func @transform_2(%arg0: i32, %arg1: i32, %arg2: i32) -> (i32, i32) {
    %c0_i32 = arith.constant 0 : i32
    return %arg1, %arg2 : i32, i32
  }
  func.func @transform_3(%arg0: i32, %arg1: i32, %arg2: i32) -> (i32, i32) {
    %c0_i32 = arith.constant 0 : i32
    return %arg1, %arg2 : i32, i32
  }
  func.func @transform_4(%arg0: i32, %arg1: i32, %arg2: i32) -> (i32, i32) {
    %c0_i32 = arith.constant 0 : i32
    return %arg0, %arg1 : i32, i32
  }
  func.func @transform_5(%arg0: i32, %arg1: i32, %arg2: i32) -> (i32, i32) {
    %c0_i32 = arith.constant 0 : i32
    return %arg0, %arg1 : i32, i32
  }
}

</mosaic_0001>

<llo_original>
// kernel: tpu_custom_call.1
$region0: #{tpu_custom_call.1}
  #allocation0 [shape = 'u32[]', space=smem, size = 0x4, offset = 0x4, fixed_abs, tag = 'smem constant byte address 0x4 - core index']
  #allocation1 [shape = 'u32[72,128]{1,0:T(1,128)}', space=vmem, size = 0x9000, scoped, tag = 'internal scratch']
  #allocation2 [shape = 'f32[8,128]{1,0:T(8,128)}', space=vmem, size = 0x1000, scoped, tag = 'scratch operand']
  #allocation3 [shape = 'f32[8,128]{1,0:T(8,128)}', space=vmem, size = 0x1000, scoped, tag = 'scratch operand']
  %s0 = inlined_call_operand.hbm [shape: f32[8,128], index: 0, kind: input, shape index: {}]
  %s1 = inlined_call_operand.hbm [shape: f32[8,128], index: 1, kind: input, shape index: {}]
  %s2 = inlined_call_operand.hbm [shape: f32[128,128], index: 2, kind: input, shape index: {}]
  %s3 = inlined_call_operand.hbm [shape: f32[128,128], index: 3, kind: input, shape index: {}]
  %s4 = inlined_call_operand.hbm [shape: f32[8,128], index: 4, kind: output, shape index: {0}]
  %s5 = inlined_call_operand.hbm [shape: f32[8,128], index: 5, kind: output, shape index: {1}]
  %6 = xla_tuple %s4, %s5
  %s7 = sld [smem:[#allocation0]]
  $region58: #{tpu_custom_call.1} parent=0
    _
  %s9 = ssub.s32 1, %s7
  %s10 = scalar_select 0, %s9, %s7
  $region1: #{tpu_custom_call.1} parent=0
    #allocation4 [shape = 'u8[4096]{0}', space=vmem, size = 0x1000, scoped, tag = 'input window, operand 0, single buffered']
    #allocation5 [shape = 's32[1]{0}', space=sflag, size = 0x4, scoped, tag = 'scoped memory for tpu_custom_call.1']
    #allocation6 [shape = 's32[1]{0}', space=sflag, size = 0x4, scoped, tag = 'scoped memory for tpu_custom_call.1']
    #allocation7 [shape = 'u8[4096]{0}', space=vmem, size = 0x1000, scoped, tag = 'input window, operand 1, single buffered']
    #allocation8 [shape = 's32[1]{0}', space=sflag, size = 0x4, scoped, tag = 'scoped memory for tpu_custom_call.1']
    #allocation9 [shape = 'u8[65536]{0}', space=vmem, size = 0x10000, scoped, tag = 'input window, operand 2, single buffered']
    #allocation10 [shape = 'u8[65536]{0}', space=vmem, size = 0x10000, scoped, tag = 'input window, operand 3, single buffered']
    #allocation11 [shape = 's32[1]{0}', space=sflag, size = 0x4, scoped, tag = 'scoped memory for tpu_custom_call.1']
    #allocation12 [shape = 'u8[4096]{0}', space=vmem, size = 0x1000, scoped, tag = 'output window, operand 0, single buffered']
    #allocation13 [shape = 'u8[4096]{0}', space=vmem, size = 0x1000, scoped, tag = 'output window, operand 1, single buffered']
    #allocation14 [shape = 's32[1]{0}', space=sflag, size = 0x4, scoped, tag = 'scoped memory for tpu_custom_call.1']
    %11 = vsyncpa [#allocation5], 0
    %12 = vsyncpa [#allocation8], 0
    %13 = vsyncpa [#allocation11], 0
    %14 = vsyncpa [#allocation6], 0
    %15 = vsyncpa [#allocation14], 0
    // Predicated region
    $region2: #{tpu_custom_call.1} parent=1 // pred_check
      _
    $region3: #{tpu_custom_call.1} parent=1 // pred_check_branch
      %17 = sbr.rel (0) target = $region5
    $region4: #{tpu_custom_call.1} parent=1 // pred_region
      %19 = vsyncadd [#allocation5], 0
      %s21 = sshll.u32 %s0, 4
      %s22 = int_to_ptr.hbm [resolvable:$true] %s21
      %s23 = sshll.u32 [#allocation4], 4
      %s24 = int_to_ptr.vmem [resolvable:$true] %s23
      %26 = dma.hbm_to_vmem [thread:$0]  %s22, 128, %s24, [#allocation5]
    $region5: #{tpu_custom_call.1} parent=1 // pred_fallthru
      _
    // Predicated region
    $region6: #{tpu_custom_call.1} parent=1 // pred_check
      _
    $region7: #{tpu_custom_call.1} parent=1 // pred_check_branch
      %28 = sbr.rel (0) target = $region9
    $region8: #{tpu_custom_call.1} parent=1 // pred_region
      %30 = vsyncadd [#allocation8], 0
      %s32 = sshll.u32 %s1, 4
      %s33 = int_to_ptr.hbm [resolvable:$true] %s32
      %s34 = sshll.u32 [#allocation7], 4
      %s35 = int_to_ptr.vmem [resolvable:$true] %s34
      %37 = dma.hbm_to_vmem [thread:$0]  %s33, 128, %s35, [#allocation8]
    $region9: #{tpu_custom_call.1} parent=1 // pred_fallthru
      _
    // Predicated region
    $region10: #{tpu_custom_call.1} parent=1 // pred_check
      _
    $region11: #{tpu_custom_call.1} parent=1 // pred_check_branch
      %39 = sbr.rel (0) target = $region13
    $region12: #{tpu_custom_call.1} parent=1 // pred_region
      %41 = vsyncadd [#allocation8], 0
      %s42 = sshll.u32 %s2, 4
      %s43 = int_to_ptr.hbm [resolvable:$true] %s42
      %s44 = sshll.u32 [#allocation9], 4
      %s45 = int_to_ptr.vmem [resolvable:$true] %s44
      %50 = dma.hbm_to_vmem [thread:$0]  %s43, 2048, %s45, [#allocation8], 128, 128, 8
    $region13: #{tpu_custom_call.1} parent=1 // pred_fallthru
      _
    // Predicated region
    $region14: #{tpu_custom_call.1} parent=1 // pred_check
      _
    $region15: #{tpu_custom_call.1} parent=1 // pred_check_branch
      %52 = sbr.rel (0) target = $region17
    $region16: #{tpu_custom_call.1} parent=1 // pred_region
      %54 = vsyncadd [#allocation11], 0
      %s55 = sshll.u32 %s3, 4
      %s56 = int_to_ptr.hbm [resolvable:$true] %s55
      %s57 = sshll.u32 [#allocation10], 4
      %s58 = int_to_ptr.vmem [resolvable:$true] %s57
      %63 = dma.hbm_to_vmem [thread:$0]  %s56, 2048, %s58, [#allocation11], 128, 128, 8
    $region17: #{tpu_custom_call.1} parent=1 // pred_fallthru
      _
    // Predicated region
    $region18: #{tpu_custom_call.1} parent=1 // pred_check
      _
    $region19: #{tpu_custom_call.1} parent=1 // pred_check_branch
      %65 = sbr.rel (0) target = $region21
    $region20: #{tpu_custom_call.1} parent=1 // pred_region
      %67 = dma.done [#allocation5], 128
    $region21: #{tpu_custom_call.1} parent=1 // pred_fallthru
      _
    // Predicated region
    $region22: #{tpu_custom_call.1} parent=1 // pred_check
      _
    $region23: #{tpu_custom_call.1} parent=1 // pred_check_branch
      %69 = sbr.rel (0) target = $region25
    $region24: #{tpu_custom_call.1} parent=1 // pred_region
      %71 = dma.done [#allocation8], 128
    $region25: #{tpu_custom_call.1} parent=1 // pred_fallthru
      _
    // Predicated region
    $region26: #{tpu_custom_call.1} parent=1 // pred_check
      _
    $region27: #{tpu_custom_call.1} parent=1 // pred_check_branch
      %73 = sbr.rel (0) target = $region29
    $region28: #{tpu_custom_call.1} parent=1 // pred_region
      %75 = dma.done [#allocation8], 2048
    $region29: #{tpu_custom_call.1} parent=1 // pred_fallthru
      _
    // Predicated region
    $region30: #{tpu_custom_call.1} parent=1 // pred_check
      _
    $region31: #{tpu_custom_call.1} parent=1 // pred_check_branch
      %77 = sbr.rel (0) target = $region33
    $region32: #{tpu_custom_call.1} parent=1 // pred_region
      %79 = dma.done [#allocation11], 2048
    $region33: #{tpu_custom_call.1} parent=1 // pred_fallthru
      _
    %p80 = scmp.eq.s32.totalorder 0, 0
    // Predicated region
    $region34: #{tpu_custom_call.1} parent=1 // pred_check
      %p81 = pneg %p80
    $region35: #{tpu_custom_call.1} parent=1 // pred_check_branch
      %83 = sbr.rel (%p81) target = $region37
    $region36: #{tpu_custom_call.1} parent=1 // pred_region
      %84 = vst [vmem:[#allocation2] sm:$0xff] 0.0
      %85 = vst [vmem:[#allocation3] sm:$0xff] 0.0
    $region37: #{tpu_custom_call.1} parent=1 // pred_fallthru
      _
    %v86 = vld [vmem:[#allocation4] sm:$0xff]
    %v87 = vld [vmem:[#allocation7] sm:$0xff]
    %v88 = vld [vmem:[#allocation9] sm:$0xff]
    %v89 = vld [vmem:[#allocation9 + $0x8] sm:$0xff]
    %v90 = vld [vmem:[#allocation9 + $0x10] sm:$0xff]
    %v91 = vld [vmem:[#allocation9 + $0x18] sm:$0xff]
    %v92 = vld [vmem:[#allocation9 + $0x20] sm:$0xff]
    %v93 = vld [vmem:[#allocation9 + $0x28] sm:$0xff]
    %v94 = vld [vmem:[#allocation9 + $0x30] sm:$0xff]
    %v95 = vld [vmem:[#allocation9 + $0x38] sm:$0xff]
    %v96 = vld [vmem:[#allocation9 + $0x40] sm:$0xff]
    %v97 = vld [vmem:[#allocation9 + $0x48] sm:$0xff]
    %v98 = vld [vmem:[#allocation9 + $0x50] sm:$0xff]
    %v99 = vld [vmem:[#allocation9 + $0x58] sm:$0xff]
    %v100 = vld [vmem:[#allocation9 + $0x60] sm:$0xff]
    %v101 = vld [vmem:[#allocation9 + $0x68] sm:$0xff]
    %v102 = vld [vmem:[#allocation9 + $0x70] sm:$0xff]
    %v103 = vld [vmem:[#allocation9 + $0x78] sm:$0xff]
    %v104 = vld [vmem:[#allocation10] sm:$0xff]
    %v105 = vld [vmem:[#allocation10 + $0x8] sm:$0xff]
    %v106 = vld [vmem:[#allocation10 + $0x10] sm:$0xff]
    %v107 = vld [vmem:[#allocation10 + $0x18] sm:$0xff]
    %v108 = vld [vmem:[#allocation10 + $0x20] sm:$0xff]
    %v109 = vld [vmem:[#allocation10 + $0x28] sm:$0xff]
    %v110 = vld [vmem:[#allocation10 + $0x30] sm:$0xff]
    %v111 = vld [vmem:[#allocation10 + $0x38] sm:$0xff]
    %v112 = vld [vmem:[#allocation10 + $0x40] sm:$0xff]
    %v113 = vld [vmem:[#allocation10 + $0x48] sm:$0xff]
    %v114 = vld [vmem:[#allocation10 + $0x50] sm:$0xff]
    %v115 = vld [vmem:[#allocation10 + $0x58] sm:$0xff]
    %v116 = vld [vmem:[#allocation10 + $0x60] sm:$0xff]
    %v117 = vld [vmem:[#allocation10 + $0x68] sm:$0xff]
    %v118 = vld [vmem:[#allocation10 + $0x70] sm:$0xff]
    %v119 = vld [vmem:[#allocation10 + $0x78] sm:$0xff]
    %120 = vmatpush.xpose.msra.mxu0 %v103
    %121 = vmatpush.xpose.msra.mxu0 %v102
    %122 = vmatpush.xpose.msra.mxu0 %v101
    %123 = vmatpush.xpose.msra.mxu0 %v100
    %124 = vmatpush.xpose.msra.mxu0 %v99
    %125 = vmatpush.xpose.msra.mxu0 %v98
    %126 = vmatpush.xpose.msra.mxu0 %v97
    %127 = vmatpush.xpose.msra.mxu0 %v96
    %128 = vmatpush.xpose.msra.mxu0 %v95
    %129 = vmatpush.xpose.msra.mxu0 %v94
    %130 = vmatpush.xpose.msra.mxu0 %v93
    %131 = vmatpush.xpose.msra.mxu0 %v92
    %132 = vmatpush.xpose.msra.mxu0 %v91
    %133 = vmatpush.xpose.msra.mxu0 %v90
    %134 = vmatpush.xpose.msra.mxu0 %v89
    %135 = vmatpush.xpose.msra.mxu0 %v88
    %136 = vmatmul.f32.gmra.mxu0 %v86
    %v137 = vpop.f32.mrf.mxu0
    %v138 = vadd.f32 0.0, %v137
    %139 = vdwg.mxu0
    %140 = vmatpush.xpose.msra.mxu0 %v119
    %141 = vmatpush.xpose.msra.mxu0 %v118
    %142 = vmatpush.xpose.msra.mxu0 %v117
    %143 = vmatpush.xpose.msra.mxu0 %v116
    %144 = vmatpush.xpose.msra.mxu0 %v115
    %145 = vmatpush.xpose.msra.mxu0 %v114
    %146 = vmatpush.xpose.msra.mxu0 %v113
    %147 = vmatpush.xpose.msra.mxu0 %v112
    %148 = vmatpush.xpose.msra.mxu0 %v111
    %149 = vmatpush.xpose.msra.mxu0 %v110
    %150 = vmatpush.xpose.msra.mxu0 %v109
    %151 = vmatpush.xpose.msra.mxu0 %v108
    %152 = vmatpush.xpose.msra.mxu0 %v107
    %153 = vmatpush.xpose.msra.mxu0 %v106
    %154 = vmatpush.xpose.msra.mxu0 %v105
    %155 = vmatpush.xpose.msra.mxu0 %v104
    %156 = vmatmul.f32.gmra.mxu0 %v87
    %v157 = vpop.f32.mrf.mxu0
    %v158 = vadd.f32 0.0, %v157
    %159 = vdwg.mxu0
    %v160 = vadd.f32 %v86, %v87
    %v161 = vadd.f32 %v88, %v104
    %v162 = vadd.f32 %v89, %v105
    %v163 = vadd.f32 %v90, %v106
    %v164 = vadd.f32 %v91, %v107
    %v165 = vadd.f32 %v92, %v108
    %v166 = vadd.f32 %v93, %v109
    %v167 = vadd.f32 %v94, %v110
    %v168 = vadd.f32 %v95, %v111
    %v169 = vadd.f32 %v96, %v112
    %v170 = vadd.f32 %v97, %v113
    %v171 = vadd.f32 %v98, %v114
    %v172 = vadd.f32 %v99, %v115
    %v173 = vadd.f32 %v100, %v116
    %v174 = vadd.f32 %v101, %v117
    %v175 = vadd.f32 %v102, %v118
    %v176 = vadd.f32 %v103, %v119
    %177 = vmatpush.xpose.msra.mxu0 %v176
    %178 = vmatpush.xpose.msra.mxu0 %v175
    %179 = vmatpush.xpose.msra.mxu0 %v174
    %180 = vmatpush.xpose.msra.mxu0 %v173
    %181 = vmatpush.xpose.msra.mxu0 %v172
    %182 = vmatpush.xpose.msra.mxu0 %v171
    %183 = vmatpush.xpose.msra.mxu0 %v170
    %184 = vmatpush.xpose.msra.mxu0 %v169
    %185 = vmatpush.xpose.msra.mxu0 %v168
    %186 = vmatpush.xpose.msra.mxu0 %v167
    %187 = vmatpush.xpose.msra.mxu0 %v166
    %188 = vmatpush.xpose.msra.mxu0 %v165
    %189 = vmatpush.xpose.msra.mxu0 %v164
    %190 = vmatpush.xpose.msra.mxu0 %v163
    %191 = vmatpush.xpose.msra.mxu0 %v162
    %192 = vmatpush.xpose.msra.mxu0 %v161
    %193 = vmatmul.f32.gmra.mxu0 %v160
    %v194 = vpop.f32.mrf.mxu0
    %v195 = vadd.f32 0.0, %v194
    %196 = vdwg.mxu0
    %v197 = vld [vmem:[#allocation2] sm:$0xff]
    %v198 = vsub.f32 %v138, %v158
    %v199 = vadd.f32 %v197, %v198
    %200 = vst [vmem:[#allocation2] sm:$0xff] %v199
    %v201 = vld [vmem:[#allocation3] sm:$0xff]
    %v202 = vsub.f32 %v195, %v138
    %v203 = vsub.f32 %v202, %v158
    %v204 = vadd.f32 %v201, %v203
    %205 = vst [vmem:[#allocation3] sm:$0xff] %v204
    // Predicated region
    $region38: #{tpu_custom_call.1} parent=1 // pred_check
      %p206 = pneg %p80
    $region39: #{tpu_custom_call.1} parent=1 // pred_check_branch
      %208 = sbr.rel (%p206) target = $region41
    $region40: #{tpu_custom_call.1} parent=1 // pred_region
      %v209 = vld [vmem:[#allocation2] sm:$0xff]
      %210 = vst [vmem:[#allocation12] sm:$0xff] %v209
      %v211 = vld [vmem:[#allocation3] sm:$0xff]
      %212 = vst [vmem:[#allocation13] sm:$0xff] %v211
    $region41: #{tpu_custom_call.1} parent=1 // pred_fallthru
      _
    // Predicated region
    $region42: #{tpu_custom_call.1} parent=1 // pred_check
      _
    $region43: #{tpu_custom_call.1} parent=1 // pred_check_branch
      %214 = sbr.rel (0) target = $region45
    $region44: #{tpu_custom_call.1} parent=1 // pred_region
      %216 = vsyncadd [#allocation6], 0
      %s218 = sshll.u32 [#allocation12], 4
      %s219 = int_to_ptr.vmem [resolvable:$true] %s218
      %s220 = sshll.u32 %s4, 4
      %s221 = int_to_ptr.hbm [resolvable:$true] %s220
      %223 = dma.vmem_to_hbm [thread:$0]  %s219, 128, %s221, [#allocation6]
    $region45: #{tpu_custom_call.1} parent=1 // pred_fallthru
      _
    // Predicated region
    $region46: #{tpu_custom_call.1} parent=1 // pred_check
      _
    $region47: #{tpu_custom_call.1} parent=1 // pred_check_branch
      %225 = sbr.rel (0) target = $region49
    $region48: #{tpu_custom_call.1} parent=1 // pred_region
      %227 = vsyncadd [#allocation14], 0
      %s229 = sshll.u32 [#allocation13], 4
      %s230 = int_to_ptr.vmem [resolvable:$true] %s229
      %s231 = sshll.u32 %s5, 4
      %s232 = int_to_ptr.hbm [resolvable:$true] %s231
      %234 = dma.vmem_to_hbm [thread:$0]  %s230, 128, %s232, [#allocation14]
    $region49: #{tpu_custom_call.1} parent=1 // pred_fallthru
      _
    // Predicated region
    $region50: #{tpu_custom_call.1} parent=1 // pred_check
      _
    $region51: #{tpu_custom_call.1} parent=1 // pred_check_branch
      %236 = sbr.rel (0) target = $region53
    $region52: #{tpu_custom_call.1} parent=1 // pred_region
      %238 = dma.done [#allocation6], 128
    $region53: #{tpu_custom_call.1} parent=1 // pred_fallthru
      _
    // Predicated region
    $region54: #{tpu_custom_call.1} parent=1 // pred_check
      _
    $region55: #{tpu_custom_call.1} parent=1 // pred_check_branch
      %240 = sbr.rel (0) target = $region57
    $region56: #{tpu_custom_call.1} parent=1 // pred_region
      %242 = dma.done [#allocation14], 128
    $region57: #{tpu_custom_call.1} parent=1 // pred_fallthru
      _
    %243 = vsyncpa [#allocation5], 1
    %244 = vsyncpa [#allocation8], 1
    %245 = vsyncpa [#allocation11], 1
    %246 = vsyncpa [#allocation6], 1
    %247 = vsyncpa [#allocation14], 1

</llo_original>
